<compile_context>
chip_gen: v7x
topology: tpu7x:2x2x1
jax: 0.10.0
libtpu: 0.0.40
codegen_flags: <defaults>
</compile_context>

<pallas_src>
import jax
import jax.numpy as jnp
from jax.experimental import pallas as pl
from jax.experimental.pallas import tpu as pltpu


def _cdiv(a, b):
    return -(-a // b)


def _round_up(a, b):
    return _cdiv(a, b) * b


def _default_row_pack():
    """2-row packing on 256-wide-MXU chips (v6e/v7x); off on 128-wide (v2-v5)."""
    try:
        kind = jax.devices()[0].device_kind.lower()
    except Exception:
        return 2
    if any(v in kind for v in ("v2", "v3", "v4", "v5")):
        return 1
    return 2


def _block_diag(w, pack):
    if pack == 1:
        return w
    k_in, k_out = w.shape
    out = jnp.zeros((k_in * pack, k_out * pack), w.dtype)
    for i in range(pack):
        out = out.at[i * k_in:(i + 1) * k_in, i * k_out:(i + 1) * k_out].set(w)
    return out


def prepare_params(params, *, row_pack=None):
    """One-time param transform (outside the per-call path).

    params: (w1, b1, w2, b2, w3, b3) with w_i stored (in, out), b_i (1, out).
    Weights are cast to bf16 (single-pass MXU operands) and block-diagonal packed
    for row_pack > 1; biases stay f32 for the f32 bias+ReLU epilogue.
    """
    if row_pack is None:
        row_pack = _default_row_pack()
    w1, b1, w2, b2, w3, b3 = params
    packed = (
        _block_diag(w1, row_pack).astype(jnp.bfloat16),
        jnp.tile(b1.astype(jnp.float32), (1, row_pack)),
        _block_diag(w2, row_pack).astype(jnp.bfloat16),
        jnp.tile(b2.astype(jnp.float32), (1, row_pack)),
        _block_diag(w3, row_pack).astype(jnp.bfloat16),
        jnp.tile(b3.astype(jnp.float32), (1, row_pack)),
    )
    return row_pack, packed


def _mlp_kernel(x_ref, w1_ref, b1_ref, w2_ref, b2_ref, w3_ref, b3_ref, o_ref):
    # bf16 MXU operands (single pass per layer), f32 accumulate, f32 bias+ReLU.
    x = x_ref[...].astype(jnp.bfloat16)
    h1 = jnp.dot(x, w1_ref[...], preferred_element_type=jnp.float32)
    h1 = jnp.maximum(h1 + b1_ref[...], 0.0)
    h2 = jnp.dot(h1.astype(jnp.bfloat16), w2_ref[...],
                 preferred_element_type=jnp.float32)
    h2 = jnp.maximum(h2 + b2_ref[...], 0.0)
    h3 = jnp.dot(h2.astype(jnp.bfloat16), w3_ref[...],
                 preferred_element_type=jnp.float32)
    o_ref[...] = jnp.maximum(h3 + b3_ref[...], 0.0).astype(o_ref.dtype)


def fully_connected_fc_forward(x, prepared, *, max_tile_rows=4096):
    """x: (B, ...) flattening to (B, 65). Returns (B, 5) float32."""
    row_pack, (w1p, b1p, w2p, b2p, w3p, b3p) = prepared

    B = x.shape[0]
    x2d = x.reshape(B, -1)
    feat = x2d.shape[1]
    assert feat == 65, f"expected 65 flattened features, got {feat}"

    # --- batch tiling: choose grid-step count first, then an 8-aligned tile ----
    R = max(_cdiv(B, row_pack), 1)              # packed rows needed
    n_tiles = max(_cdiv(R, max_tile_rows), 1)   # grid steps
    TB = _round_up(_cdiv(R, n_tiles), 8)        # tile rows (multiple of 8 sublanes)
    Rp = n_tiles * TB                           # padded packed rows (waste <= 8*n_tiles)
    total_rows = Rp * row_pack
    if total_rows != B:
        x2d = jnp.pad(x2d, ((0, total_rows - B), (0, 0)))
    xp = x2d.reshape(Rp, row_pack * feat)       # contiguous -> free reshape

    kin = row_pack * feat
    nout = 5 * row_pack

    in_specs = [
        # Streamed, double-buffered x tiles.
        pl.BlockSpec((TB, kin), lambda i: (i, 0)),
        # Weights/biases: constant block index -> fetched once, VMEM-resident.
        # (pl.Buffered(1) would also drop their double-buffer alloc (~0.2 MiB);
        #  skipped for portability since the saving is negligible.)
        pl.BlockSpec(w1p.shape, lambda i: (0, 0)),
        pl.BlockSpec(b1p.shape, lambda i: (0, 0)),
        pl.BlockSpec(w2p.shape, lambda i: (0, 0)),
        pl.BlockSpec(b2p.shape, lambda i: (0, 0)),
        pl.BlockSpec(w3p.shape, lambda i: (0, 0)),
        pl.BlockSpec(b3p.shape, lambda i: (0, 0)),
    ]
    out_specs = pl.BlockSpec((TB, nout), lambda i: (i, 0))

    x_bytes = jnp.dtype(x2d.dtype).itemsize
    weight_bytes = sum(int(p.size) * jnp.dtype(p.dtype).itemsize
                       for p in (w1p, b1p, w2p, b2p, w3p, b3p))
    cost = pl.CostEstimate(
        flops=2 * total_rows * (65 * 128 + 128 * 32 + 32 * 5),
        bytes_accessed=total_rows * (65 * x_bytes + 5 * 4) + weight_bytes,
        transcendentals=0,
    )

    out = pl.pallas_call(
        _mlp_kernel,
        out_shape=jax.ShapeDtypeStruct((Rp, nout), jnp.float32),
        grid=(n_tiles,),
        in_specs=in_specs,
        out_specs=out_specs,
        compiler_params=pltpu.CompilerParams(
            # Independent batch tiles.  On v7x, confirm in the trace that both
            # TensorCores are busy; if not, switch this axis to pltpu.CORE_PARALLEL.
            dimension_semantics=("parallel",),
            vmem_limit_bytes=48 * 1024 * 1024,  # headroom under v7x's 64 MiB
        ),
        cost_estimate=cost,
    )(xp, w1p, b1p, w2p, b2p, w3p, b3p)

    # (Rp, 5*pack) -> (Rp*pack, 5); drop padded rows.
    return out.reshape(Rp * row_pack, 5)[:B]


def init_params(key):
    """Deterministic init mirroring nn.Linear shapes.

    PyTorch stores weight as (out, in); we store the transpose (in, out) so the
    kernel computes x @ W directly. Biases kept as (1, out) for 2D TPU layout.
    """
    def linear(key, fan_in, fan_out):
        kw, kb = jax.random.split(key)
        bound = 1.0 / jnp.sqrt(fan_in)
        w = jax.random.uniform(kw, (fan_in, fan_out), jnp.float32, -bound, bound)
        b = jax.random.uniform(kb, (1, fan_out), jnp.float32, -bound, bound)
        return w, b

    k1, k2, k3 = jax.random.split(key, 3)
    w1, b1 = linear(k1, 65, 128)   # fc1: Linear(65, 128)
    w2, b2 = linear(k2, 128, 32)   # fc2: Linear(128, 32)
    w3, b3 = linear(k3, 32, 5)     # fc : Linear(32, 5)
    return (w1, b1, w2, b2, w3, b3)


if __name__ == "__main__":
    key = jax.random.PRNGKey(0)
    kp, kx = jax.random.split(key)

    params = init_params(kp)
    prepared = prepare_params(params)   # bf16 cast + (optional) 2-row packing, once

    # Small batch whose trailing dims flatten to 65 features (exercises flatten).
    x = jax.random.normal(kx, (8, 5, 13), jnp.float32)

    y = fully_connected_fc_forward(x, prepared)
    y = jax.block_until_ready(y)

    # Sanity check vs f32 JAX reference (kernel uses bf16 MXU operands -> looser tol).
    w1, b1, w2, b2, w3, b3 = params
    xf = x.reshape(x.shape[0], -1)
    h = jnp.maximum(xf @ w1 + b1, 0.0)
    h = jnp.maximum(h @ w2 + b2, 0.0)
    ref = jnp.maximum(h @ w3 + b3, 0.0)

    assert y.shape == (8, 5)
    assert jnp.allclose(y, ref, atol=2e-2, rtol=2e-2), float(jnp.max(jnp.abs(y - ref)))

    print("KERNEL_OK")
</pallas_src>

<mosaic_0001>
module attributes {stable_mosaic.version = 11 : i64} {
  func.func @_mlp_kernel(%arg0: i32, %arg1: memref<8x130xf32, #tpu.memory_space<vmem>>, %arg2: memref<130x256xbf16, #tpu.memory_space<vmem>>, %arg3: memref<1x256xf32, #tpu.memory_space<vmem>>, %arg4: memref<256x64xbf16, #tpu.memory_space<vmem>>, %arg5: memref<1x64xf32, #tpu.memory_space<vmem>>, %arg6: memref<64x10xbf16, #tpu.memory_space<vmem>>, %arg7: memref<1x10xf32, #tpu.memory_space<vmem>>, %arg8: memref<8x10xf32, #tpu.memory_space<vmem>>) attributes {dimension_semantics = [#tpu.dimension_semantics<parallel>], iteration_bounds = array<i64: 1>, scalar_prefetch = 0 : i64, scratch_operands = 0 : i64, tpu.core_type = #tpu.core_type<tc>, window_params = [{transform_indices = @transform_0, window_bounds = array<i64: 8, 130>}, {pipeline_mode = #tpu.pipeline_mode<synchronous>, transform_indices = @transform_1, window_bounds = array<i64: 130, 256>}, {pipeline_mode = #tpu.pipeline_mode<synchronous>, transform_indices = @transform_2, window_bounds = array<i64: 1, 256>}, {pipeline_mode = #tpu.pipeline_mode<synchronous>, transform_indices = @transform_3, window_bounds = array<i64: 256, 64>}, {pipeline_mode = #tpu.pipeline_mode<synchronous>, transform_indices = @transform_4, window_bounds = array<i64: 1, 64>}, {pipeline_mode = #tpu.pipeline_mode<synchronous>, transform_indices = @transform_5, window_bounds = array<i64: 64, 10>}, {pipeline_mode = #tpu.pipeline_mode<synchronous>, transform_indices = @transform_6, window_bounds = array<i64: 1, 10>}, {transform_indices = @transform_7, window_bounds = array<i64: 8, 10>}]} {
    %c0 = arith.constant 0 : index
    %c0_0 = arith.constant 0 : index
    %0 = vector.load %arg1[%c0, %c0_0] : memref<8x130xf32, #tpu.memory_space<vmem>>, vector<8x130xf32>
    %1 = arith.truncf %0 : vector<8x130xf32> to vector<8x130xbf16>
    %c0_1 = arith.constant 0 : index
    %c0_2 = arith.constant 0 : index
    %2 = vector.load %arg2[%c0_1, %c0_2] : memref<130x256xbf16, #tpu.memory_space<vmem>>, vector<130x256xbf16>
    %cst = arith.constant dense<0.000000e+00> : vector<8x256xf32>
    %3 = tpu.matmul %1, %2, %cst {dimension_numbers = #tpu.dot_dimension_numbers<[1], [0], [0], [1], [0, 0, 1, 1], [], []>} : vector<8x130xbf16>, vector<130x256xbf16>, vector<8x256xf32> -> vector<8x256xf32>
    %c0_3 = arith.constant 0 : index
    %c0_4 = arith.constant 0 : index
    %4 = vector.load %arg3[%c0_3, %c0_4] : memref<1x256xf32, #tpu.memory_space<vmem>>, vector<1x256xf32>
    %5 = vector.broadcast %4 : vector<1x256xf32> to vector<8x256xf32>
    %6 = arith.addf %3, %5 : vector<8x256xf32>
    %cst_5 = arith.constant 0.000000e+00 : f32
    %7 = vector.broadcast %cst_5 : f32 to vector<8x256xf32>
    %8 = arith.maximumf %6, %7 : vector<8x256xf32>
    %9 = arith.truncf %8 : vector<8x256xf32> to vector<8x256xbf16>
    %c0_6 = arith.constant 0 : index
    %c0_7 = arith.constant 0 : index
    %10 = vector.load %arg4[%c0_6, %c0_7] : memref<256x64xbf16, #tpu.memory_space<vmem>>, vector<256x64xbf16>
    %cst_8 = arith.constant dense<0.000000e+00> : vector<8x64xf32>
    %11 = tpu.matmul %9, %10, %cst_8 {dimension_numbers = #tpu.dot_dimension_numbers<[1], [0], [0], [1], [0, 0, 1, 1], [], []>} : vector<8x256xbf16>, vector<256x64xbf16>, vector<8x64xf32> -> vector<8x64xf32>
    %c0_9 = arith.constant 0 : index
    %c0_10 = arith.constant 0 : index
    %12 = vector.load %arg5[%c0_9, %c0_10] : memref<1x64xf32, #tpu.memory_space<vmem>>, vector<1x64xf32>
    %13 = vector.broadcast %12 : vector<1x64xf32> to vector<8x64xf32>
    %14 = arith.addf %11, %13 : vector<8x64xf32>
    %cst_11 = arith.constant 0.000000e+00 : f32
    %15 = vector.broadcast %cst_11 : f32 to vector<8x64xf32>
    %16 = arith.maximumf %14, %15 : vector<8x64xf32>
    %17 = arith.truncf %16 : vector<8x64xf32> to vector<8x64xbf16>
    %c0_12 = arith.constant 0 : index
    %c0_13 = arith.constant 0 : index
    %18 = vector.load %arg6[%c0_12, %c0_13] : memref<64x10xbf16, #tpu.memory_space<vmem>>, vector<64x10xbf16>
    %cst_14 = arith.constant dense<0.000000e+00> : vector<8x10xf32>
    %19 = tpu.matmul %17, %18, %cst_14 {dimension_numbers = #tpu.dot_dimension_numbers<[1], [0], [0], [1], [0, 0, 1, 1], [], []>} : vector<8x64xbf16>, vector<64x10xbf16>, vector<8x10xf32> -> vector<8x10xf32>
    %c0_15 = arith.constant 0 : index
    %c0_16 = arith.constant 0 : index
    %20 = vector.load %arg7[%c0_15, %c0_16] : memref<1x10xf32, #tpu.memory_space<vmem>>, vector<1x10xf32>
    %21 = vector.broadcast %20 : vector<1x10xf32> to vector<8x10xf32>
    %22 = arith.addf %19, %21 : vector<8x10xf32>
    %cst_17 = arith.constant 0.000000e+00 : f32
    %23 = vector.broadcast %cst_17 : f32 to vector<8x10xf32>
    %24 = arith.maximumf %22, %23 : vector<8x10xf32>
    %c0_18 = arith.constant 0 : index
    %c0_19 = arith.constant 0 : index
    %25 = vector.load %arg8[%c0_18, %c0_19] : memref<8x10xf32, #tpu.memory_space<vmem>>, vector<8x10xf32>
    tpu.vector_store %arg8[%c0_18, %c0_19], %24 {strides = array<i32>} : memref<8x10xf32, #tpu.memory_space<vmem>>, vector<8x10xf32>,
    return
  }
  func.func @transform_0(%arg0: i32) -> (i32, i32) {
    %c0_i32 = arith.constant 0 : i32
    %c0_i32_0 = arith.constant 0 : i32
    return %arg0, %c0_i32 : i32, i32
  }
  func.func @transform_1(%arg0: i32) -> (i32, i32) {
    %c0_i32 = arith.constant 0 : i32
    %c0_i32_0 = arith.constant 0 : i32
    %c0_i32_1 = arith.constant 0 : i32
    return %c0_i32, %c0_i32_0 : i32, i32
  }
  func.func @transform_2(%arg0: i32) -> (i32, i32) {
    %c0_i32 = arith.constant 0 : i32
    %c0_i32_0 = arith.constant 0 : i32
    %c0_i32_1 = arith.constant 0 : i32
    return %c0_i32, %c0_i32_0 : i32, i32
  }
  func.func @transform_3(%arg0: i32) -> (i32, i32) {
    %c0_i32 = arith.constant 0 : i32
    %c0_i32_0 = arith.constant 0 : i32
    %c0_i32_1 = arith.constant 0 : i32
    return %c0_i32, %c0_i32_0 : i32, i32
  }
  func.func @transform_4(%arg0: i32) -> (i32, i32) {
    %c0_i32 = arith.constant 0 : i32
    %c0_i32_0 = arith.constant 0 : i32
    %c0_i32_1 = arith.constant 0 : i32
    return %c0_i32, %c0_i32_0 : i32, i32
  }
  func.func @transform_5(%arg0: i32) -> (i32, i32) {
    %c0_i32 = arith.constant 0 : i32
    %c0_i32_0 = arith.constant 0 : i32
    %c0_i32_1 = arith.constant 0 : i32
    return %c0_i32, %c0_i32_0 : i32, i32
  }
  func.func @transform_6(%arg0: i32) -> (i32, i32) {
    %c0_i32 = arith.constant 0 : i32
    %c0_i32_0 = arith.constant 0 : i32
    %c0_i32_1 = arith.constant 0 : i32
    return %c0_i32, %c0_i32_0 : i32, i32
  }
  func.func @transform_7(%arg0: i32) -> (i32, i32) {
    %c0_i32 = arith.constant 0 : i32
    %c0_i32_0 = arith.constant 0 : i32
    return %arg0, %c0_i32 : i32, i32
  }
}

</mosaic_0001>

<llo_original>
// kernel: tpu_custom_call.1
$region0: #{tpu_custom_call.1}
  #allocation0 [shape = 'u32[]', space=smem, size = 0x4, offset = 0x4, fixed_abs, tag = 'smem constant byte address 0x4 - core index']
  #allocation1 [shape = 'u32[144,128]{1,0:T(1,128)}', space=vmem, size = 0x12000, scoped, tag = 'internal scratch']
  %s0 = inlined_call_operand.vmem [shape: f32[8,130], index: 0, kind: input, shape index: {}]
  %s1 = inlined_call_operand.vmem [shape: bf16[130,256], index: 1, kind: input, shape index: {}]
  %s2 = inlined_call_operand.vmem [shape: f32[1,256], index: 2, kind: input, shape index: {}]
  %s3 = inlined_call_operand.vmem [shape: bf16[256,64], index: 3, kind: input, shape index: {}]
  %s4 = inlined_call_operand.vmem [shape: f32[1,64], index: 4, kind: input, shape index: {}]
  %s5 = inlined_call_operand.vmem [shape: bf16[64,10], index: 5, kind: input, shape index: {}]
  %s6 = inlined_call_operand.vmem [shape: f32[1,10], index: 6, kind: input, shape index: {}]
  %s7 = inlined_call_operand.hbm [shape: f32[8,10], index: 7, kind: output, shape index: {}]
  %s8 = sld [smem:[#allocation0]]
  $region38: #{tpu_custom_call.1} parent=0
    _
  %s10 = ssub.s32 1, %s8
  %s11 = scalar_select 0, %s10, %s8
  $region1: #{tpu_custom_call.1} parent=0
    #allocation2 [shape = 'u8[4096]{0}', space=vmem, size = 0x1000, scoped, tag = 'output window, operand 0, single buffered']
    #allocation3 [shape = 's32[1]{0}', space=sflag, size = 0x4, scoped, tag = 'scoped memory for tpu_custom_call.1']
    %12 = vsyncpa [#allocation3], 0
    // Predicated region
    $region2: #{tpu_custom_call.1} parent=1 // pred_check
      _
    $region3: #{tpu_custom_call.1} parent=1 // pred_check_branch
      %14 = sbr.rel (0) target = $region5
    $region4: #{tpu_custom_call.1} parent=1 // pred_region
      _
    $region5: #{tpu_custom_call.1} parent=1 // pred_fallthru
      _
    // Predicated region
    $region6: #{tpu_custom_call.1} parent=1 // pred_check
      _
    $region7: #{tpu_custom_call.1} parent=1 // pred_check_branch
      %16 = sbr.rel (0) target = $region9
    $region8: #{tpu_custom_call.1} parent=1 // pred_region
      _
    $region9: #{tpu_custom_call.1} parent=1 // pred_fallthru
      _
    // Predicated region
    $region10: #{tpu_custom_call.1} parent=1 // pred_check
      _
    $region11: #{tpu_custom_call.1} parent=1 // pred_check_branch
      %18 = sbr.rel (0) target = $region13
    $region12: #{tpu_custom_call.1} parent=1 // pred_region
      _
    $region13: #{tpu_custom_call.1} parent=1 // pred_fallthru
      _
    // Predicated region
    $region14: #{tpu_custom_call.1} parent=1 // pred_check
      _
    $region15: #{tpu_custom_call.1} parent=1 // pred_check_branch
      %20 = sbr.rel (0) target = $region17
    $region16: #{tpu_custom_call.1} parent=1 // pred_region
      _
    $region17: #{tpu_custom_call.1} parent=1 // pred_fallthru
      _
    // Predicated region
    $region18: #{tpu_custom_call.1} parent=1 // pred_check
      _
    $region19: #{tpu_custom_call.1} parent=1 // pred_check_branch
      %22 = sbr.rel (0) target = $region21
    $region20: #{tpu_custom_call.1} parent=1 // pred_region
      _
    $region21: #{tpu_custom_call.1} parent=1 // pred_fallthru
      _
    // Predicated region
    $region22: #{tpu_custom_call.1} parent=1 // pred_check
      _
    $region23: #{tpu_custom_call.1} parent=1 // pred_check_branch
      %24 = sbr.rel (0) target = $region25
    $region24: #{tpu_custom_call.1} parent=1 // pred_region
      _
    $region25: #{tpu_custom_call.1} parent=1 // pred_fallthru
      _
    // Predicated region
    $region26: #{tpu_custom_call.1} parent=1 // pred_check
      _
    $region27: #{tpu_custom_call.1} parent=1 // pred_check_branch
      %26 = sbr.rel (0) target = $region29
    $region28: #{tpu_custom_call.1} parent=1 // pred_region
      _
    $region29: #{tpu_custom_call.1} parent=1 // pred_fallthru
      _
    %v28 = vld [vmem:[%s0] sm:$0xff]
    %v29 = vld [vmem:[%s0 + $0x8] sm:$0xff]
    %v30 = vpack.c.bf16 %v28, %v28
    %v31 = vpack.c.bf16 %v29, %v29
    %v32 = vld [vmem:[%s1] sm:$0xff]
    %v33 = vld [vmem:[%s1 + $0x8] sm:$0xff]
    %v34 = vld [vmem:[%s1 + $0x10] sm:$0xff]
    %v35 = vld [vmem:[%s1 + $0x18] sm:$0xff]
    %v36 = vld [vmem:[%s1 + $0x20] sm:$0xff]
    %v37 = vld [vmem:[%s1 + $0x28] sm:$0xff]
    %v38 = vld [vmem:[%s1 + $0x30] sm:$0xff]
    %v39 = vld [vmem:[%s1 + $0x38] sm:$0xff]
    %v40 = vld [vmem:[%s1 + $0x40] sm:$0xff]
    %v41 = vld [vmem:[%s1 + $0x48] sm:$0xff]
    %v42 = vld [vmem:[%s1 + $0x50] sm:$0xff]
    %v43 = vld [vmem:[%s1 + $0x58] sm:$0xff]
    %v44 = vld [vmem:[%s1 + $0x60] sm:$0xff]
    %v45 = vld [vmem:[%s1 + $0x68] sm:$0xff]
    %v46 = vld [vmem:[%s1 + $0x70] sm:$0xff]
    %v47 = vld [vmem:[%s1 + $0x78] sm:$0xff]
    %v48 = vld [vmem:[%s1 + $0x80] sm:$0x11]
    %v49 = vld [vmem:[%s2] sm:$0x3]
    %v51 = vlaneseq
    %v52 = vshrl.u32 %v51, 7
    %v53 = vsub.s32 0, %v52
    %v54 = vrot.slane %v49, %v53
    %v55 = vlaneseq
    %v56 = vshrl.u32 %v55, 7
    %v57 = vsub.s32 1, %v56
    %v58 = vrot.slane %v49, %v57
    %v78 = vunpack.c.l.b16 %v32
    %v79 = vunpack.c.h.b16 %v32
    %v80 = vunpack.c.l.b16 %v33
    %v81 = vunpack.c.h.b16 %v33
    %v82 = vunpack.c.l.b16 %v34
    %v83 = vunpack.c.h.b16 %v34
    %v84 = vunpack.c.l.b16 %v35
    %v85 = vunpack.c.h.b16 %v35
    %v86 = vunpack.c.l.b16 %v36
    %v87 = vunpack.c.h.b16 %v36
    %v88 = vunpack.c.l.b16 %v37
    %v89 = vunpack.c.h.b16 %v37
    %v90 = vunpack.c.l.b16 %v38
    %v91 = vunpack.c.h.b16 %v38
    %v92 = vunpack.c.l.b16 %v39
    %v93 = vunpack.c.h.b16 %v39
    %v94 = vunpack.c.l.b16 %v40
    %v95 = vunpack.c.h.b16 %v40
    %v96 = vunpack.c.l.b16 %v41
    %v97 = vunpack.c.h.b16 %v41
    %v98 = vunpack.c.l.b16 %v42
    %v99 = vunpack.c.h.b16 %v42
    %v100 = vunpack.c.l.b16 %v43
    %v101 = vunpack.c.h.b16 %v43
    %v102 = vunpack.c.l.b16 %v44
    %v103 = vunpack.c.h.b16 %v44
    %v104 = vunpack.c.l.b16 %v45
    %v105 = vunpack.c.h.b16 %v45
    %v106 = vunpack.c.l.b16 %v46
    %v107 = vunpack.c.h.b16 %v46
    %v108 = vunpack.c.l.b16 %v47
    %v109 = vunpack.c.h.b16 %v47
    %v110 = vunpack.c.l.b16 %v48
    %v111 = vunpack.c.h.b16 %v48
    %v112 = vpack.c.b16 %v80, %v78
    %v113 = vpack.c.b16 %v81, %v79
    %v114 = vpack.c.b16 %v84, %v82
    %v115 = vpack.c.b16 %v85, %v83
    %v116 = vpack.c.b16 %v88, %v86
    %v117 = vpack.c.b16 %v89, %v87
    %v118 = vpack.c.b16 %v92, %v90
    %v119 = vpack.c.b16 %v93, %v91
    %v120 = vpack.c.b16 %v96, %v94
    %v121 = vpack.c.b16 %v97, %v95
    %v122 = vpack.c.b16 %v100, %v98
    %v123 = vpack.c.b16 %v101, %v99
    %v124 = vpack.c.b16 %v104, %v102
    %v125 = vpack.c.b16 %v105, %v103
    %v126 = vpack.c.b16 %v108, %v106
    %v127 = vpack.c.b16 %v109, %v107
    %v128 = vpack.c.b16 %v110, %v110
    %v129 = vpack.c.b16 %v111, %v111
    %vm146 = vcmask 15360
    %v148 = vsel %vm146, %v31, 0
    %vm150 = vcmask 1040384
    %v152 = vsel %vm150, %v128, 0
    %v155 = vsel %vm150, %v129, 0
    %157 = vmatprep.subr.bf16.mxu0 %v113
    %158 = vmatpush1.bf16.msra.mxu0 %v112
    %159 = vmatprep.subr.bf16.mxu0 %v115
    %160 = vmatpush1.bf16.msra.mxu0 %v114
    %161 = vmatprep.subr.bf16.mxu0 %v117
    %162 = vmatpush1.bf16.msra.mxu0 %v116
    %163 = vmatprep.subr.bf16.mxu0 %v119
    %164 = vmatpush1.bf16.msra.mxu0 %v118
    %165 = vmatprep.subr.bf16.mxu0 %v121
    %166 = vmatpush1.bf16.msra.mxu0 %v120
    %167 = vmatprep.subr.bf16.mxu0 %v123
    %168 = vmatpush1.bf16.msra.mxu0 %v122
    %169 = vmatprep.subr.bf16.mxu0 %v125
    %170 = vmatpush1.bf16.msra.mxu0 %v124
    %171 = vmatprep.subr.bf16.mxu0 %v127
    %172 = vmatpush1.bf16.msra.mxu0 %v126
    %173 = vmatprep.subr.bf16.mxu0 %v155
    %174 = vmatpush1.bf16.msra.mxu0 %v152
    %175 = vmatprep.subr.bf16.mxu0 0
    %176 = vmatpush1.bf16.msra.mxu0 0
    %177 = vmatprep.subr.bf16.mxu0 0
    %178 = vmatpush1.bf16.msra.mxu0 0
    %179 = vmatprep.subr.bf16.mxu0 0
    %180 = vmatpush1.bf16.msra.mxu0 0
    %181 = vmatprep.subr.bf16.mxu0 0
    %182 = vmatpush1.bf16.msra.mxu0 0
    %183 = vmatprep.subr.bf16.mxu0 0
    %184 = vmatpush1.bf16.msra.mxu0 0
    %185 = vmatprep.subr.bf16.mxu0 0
    %186 = vmatpush1.bf16.msra.mxu0 0
    %187 = vmatprep.subr.bf16.mxu0 0
    %188 = vmatpush1.bf16.msra.mxu0 0
    %189 = vmatprep.mubr.bf16.mxu0 %v148
    %190 = vmatmul.mubr.bf16.gmra.mrb[0].mxu0 %v30
    %v191 = vpop.f32.mrb[0].mxu0
    %v192 = vadd.f32 %v54, %v191
    %v193 = vpop.f32.mrb[0].mxu0
    %v194 = vadd.f32 %v58, %v193
    %v195 = vpop.f32.mrb[0].mxu0
    %v196 = vpop.f32.mrb[0].mxu0
    %197 = vdwg.mxu0
    %v198 = vmax.f32 %v192, 0.0
    %v199 = vmax.f32 %v194, 0.0
    %v200 = vpack.c.bf16 %v198, %v198
    %v201 = vpack.c.bf16 %v199, %v199
    %v202 = vld [vmem:[%s3] sm:$0xf]
    %v203 = vld [vmem:[%s3 + $0x4] sm:$0xf]
    %v204 = vld [vmem:[%s3 + $0x8] sm:$0xf]
    %v205 = vld [vmem:[%s3 + $0xc] sm:$0xf]
    %v206 = vld [vmem:[%s3 + $0x10] sm:$0xf]
    %v207 = vld [vmem:[%s3 + $0x14] sm:$0xf]
    %v208 = vld [vmem:[%s3 + $0x18] sm:$0xf]
    %v209 = vld [vmem:[%s3 + $0x1c] sm:$0xf]
    %v210 = vld [vmem:[%s3 + $0x20] sm:$0xf]
    %v211 = vld [vmem:[%s3 + $0x24] sm:$0xf]
    %v212 = vld [vmem:[%s3 + $0x28] sm:$0xf]
    %v213 = vld [vmem:[%s3 + $0x2c] sm:$0xf]
    %v214 = vld [vmem:[%s3 + $0x30] sm:$0xf]
    %v215 = vld [vmem:[%s3 + $0x34] sm:$0xf]
    %v216 = vld [vmem:[%s3 + $0x38] sm:$0xf]
    %v217 = vld [vmem:[%s3 + $0x3c] sm:$0xf]
    %v218 = vld [vmem:[%s3 + $0x40] sm:$0xf]
    %v219 = vld [vmem:[%s3 + $0x44] sm:$0xf]
    %v220 = vld [vmem:[%s3 + $0x48] sm:$0xf]
    %v221 = vld [vmem:[%s3 + $0x4c] sm:$0xf]
    %v222 = vld [vmem:[%s3 + $0x50] sm:$0xf]
    %v223 = vld [vmem:[%s3 + $0x54] sm:$0xf]
    %v224 = vld [vmem:[%s3 + $0x58] sm:$0xf]
    %v225 = vld [vmem:[%s3 + $0x5c] sm:$0xf]
    %v226 = vld [vmem:[%s3 + $0x60] sm:$0xf]
    %v227 = vld [vmem:[%s3 + $0x64] sm:$0xf]
    %v228 = vld [vmem:[%s3 + $0x68] sm:$0xf]
    %v229 = vld [vmem:[%s3 + $0x6c] sm:$0xf]
    %v230 = vld [vmem:[%s3 + $0x70] sm:$0xf]
    %v231 = vld [vmem:[%s3 + $0x74] sm:$0xf]
    %v232 = vld [vmem:[%s3 + $0x78] sm:$0xf]
    %v233 = vld [vmem:[%s3 + $0x7c] sm:$0xf]
    %v234 = vld [vmem:[%s4] sm:$0x1]
    %v236 = vlaneseq
    %v237 = vshrl.u32 %v236, 7
    %v238 = vsub.s32 0, %v237
    %v239 = vrot.slane %v234, %v238
    %v273 = vunpack.c.l.b16 %v202
    %v274 = vunpack.c.l.b16 %v203
    %v275 = vunpack.c.l.b16 %v204
    %v276 = vunpack.c.l.b16 %v205
    %v277 = vunpack.c.l.b16 %v206
    %v278 = vunpack.c.l.b16 %v207
    %v279 = vunpack.c.l.b16 %v208
    %v280 = vunpack.c.l.b16 %v209
    %v281 = vunpack.c.l.b16 %v210
    %v282 = vunpack.c.l.b16 %v211
    %v283 = vunpack.c.l.b16 %v212
    %v284 = vunpack.c.l.b16 %v213
    %v285 = vunpack.c.l.b16 %v214
    %v286 = vunpack.c.l.b16 %v215
    %v287 = vunpack.c.l.b16 %v216
    %v288 = vunpack.c.l.b16 %v217
    %v289 = vunpack.c.l.b16 %v218
    %v290 = vunpack.c.l.b16 %v219
    %v291 = vunpack.c.l.b16 %v220
    %v292 = vunpack.c.l.b16 %v221
    %v293 = vunpack.c.l.b16 %v222
    %v294 = vunpack.c.l.b16 %v223
    %v295 = vunpack.c.l.b16 %v224
    %v296 = vunpack.c.l.b16 %v225
    %v297 = vunpack.c.l.b16 %v226
    %v298 = vunpack.c.l.b16 %v227
    %v299 = vunpack.c.l.b16 %v228
    %v300 = vunpack.c.l.b16 %v229
    %v301 = vunpack.c.l.b16 %v230
    %v302 = vunpack.c.l.b16 %v231
    %v303 = vunpack.c.l.b16 %v232
    %v304 = vunpack.c.l.b16 %v233
    %v305 = vpack.c.b16 %v274, %v273
    %v306 = vpack.c.b16 %v276, %v275
    %v307 = vpack.c.b16 %v278, %v277
    %v308 = vpack.c.b16 %v280, %v279
    %v309 = vpack.c.b16 %v282, %v281
    %v310 = vpack.c.b16 %v284, %v283
    %v311 = vpack.c.b16 %v286, %v285
    %v312 = vpack.c.b16 %v288, %v287
    %v313 = vpack.c.b16 %v290, %v289
    %v314 = vpack.c.b16 %v292, %v291
    %v315 = vpack.c.b16 %v294, %v293
    %v316 = vpack.c.b16 %v296, %v295
    %v317 = vpack.c.b16 %v298, %v297
    %v318 = vpack.c.b16 %v300, %v299
    %v319 = vpack.c.b16 %v302, %v301
    %v320 = vpack.c.b16 %v304, %v303
    %337 = vmatprep.subr.bf16.mxu0 0
    %338 = vmatpush1.bf16.msra.mxu0 %v305
    %339 = vmatprep.subr.bf16.mxu0 0
    %340 = vmatpush1.bf16.msra.mxu0 %v306
    %341 = vmatprep.subr.bf16.mxu0 0
    %342 = vmatpush1.bf16.msra.mxu0 %v307
    %343 = vmatprep.subr.bf16.mxu0 0
    %344 = vmatpush1.bf16.msra.mxu0 %v308
    %345 = vmatprep.subr.bf16.mxu0 0
    %346 = vmatpush1.bf16.msra.mxu0 %v309
    %347 = vmatprep.subr.bf16.mxu0 0
    %348 = vmatpush1.bf16.msra.mxu0 %v310
    %349 = vmatprep.subr.bf16.mxu0 0
    %350 = vmatpush1.bf16.msra.mxu0 %v311
    %351 = vmatprep.subr.bf16.mxu0 0
    %352 = vmatpush1.bf16.msra.mxu0 %v312
    %353 = vmatprep.subr.bf16.mxu0 0
    %354 = vmatpush1.bf16.msra.mxu0 %v313
    %355 = vmatprep.subr.bf16.mxu0 0
    %356 = vmatpush1.bf16.msra.mxu0 %v314
    %357 = vmatprep.subr.bf16.mxu0 0
    %358 = vmatpush1.bf16.msra.mxu0 %v315
    %359 = vmatprep.subr.bf16.mxu0 0
    %360 = vmatpush1.bf16.msra.mxu0 %v316
    %361 = vmatprep.subr.bf16.mxu0 0
    %362 = vmatpush1.bf16.msra.mxu0 %v317
    %363 = vmatprep.subr.bf16.mxu0 0
    %364 = vmatpush1.bf16.msra.mxu0 %v318
    %365 = vmatprep.subr.bf16.mxu0 0
    %366 = vmatpush1.bf16.msra.mxu0 %v319
    %367 = vmatprep.subr.bf16.mxu0 0
    %368 = vmatpush1.bf16.msra.mxu0 %v320
    %369 = vmatprep.mubr.bf16.mxu0 %v201
    %370 = vmatmul.mubr.bf16.gmra.mrb[0].mxu0 %v200
    %v371 = vpop.f32.mrb[0].mxu0
    %v372 = vadd.f32 %v239, %v371
    %v373 = vpop.f32.mrb[0].mxu0
    %v374 = vpop.f32.mrb[0].mxu0
    %v375 = vpop.f32.mrb[0].mxu0
    %376 = vdwg.mxu0
    %v377 = vmax.f32 %v372, 0.0
    %v378 = vpack.c.bf16 %v377, %v377
    %v379 = vld [vmem:[%s5] sm:$0xf]
    %v380 = vld [vmem:[%s5 + $0x4] sm:$0xf]
    %v381 = vld [vmem:[%s5 + $0x8] sm:$0xf]
    %v382 = vld [vmem:[%s5 + $0xc] sm:$0xf]
    %v383 = vld [vmem:[%s5 + $0x10] sm:$0xf]
    %v384 = vld [vmem:[%s5 + $0x14] sm:$0xf]
    %v385 = vld [vmem:[%s5 + $0x18] sm:$0xf]
    %v386 = vld [vmem:[%s5 + $0x1c] sm:$0xf]
    %v387 = vld [vmem:[%s6] sm:$0x1]
    %v389 = vlaneseq
    %v390 = vshrl.u32 %v389, 7
    %v391 = vsub.s32 0, %v390
    %v392 = vrot.slane %v387, %v391
    %v402 = vunpack.c.l.b16 %v379
    %v403 = vunpack.c.l.b16 %v380
    %v404 = vunpack.c.l.b16 %v381
    %v405 = vunpack.c.l.b16 %v382
    %v406 = vunpack.c.l.b16 %v383
    %v407 = vunpack.c.l.b16 %v384
    %v408 = vunpack.c.l.b16 %v385
    %v409 = vunpack.c.l.b16 %v386
    %v410 = vpack.c.b16 %v403, %v402
    %v411 = vpack.c.b16 %v405, %v404
    %v412 = vpack.c.b16 %v407, %v406
    %v413 = vpack.c.b16 %v409, %v408
    %vm418 = vcmask 523264
    %v420 = vsel %vm418, %v378, 0
    %422 = vmatprep.subr.bf16.mxu0 0
    %423 = vmatpush1.bf16.msra.mxu0 %v410
    %424 = vmatprep.subr.bf16.mxu0 0
    %425 = vmatpush1.bf16.msra.mxu0 %v411
    %426 = vmatprep.subr.bf16.mxu0 0
    %427 = vmatpush1.bf16.msra.mxu0 %v412
    %428 = vmatprep.subr.bf16.mxu0 0
    %429 = vmatpush1.bf16.msra.mxu0 %v413
    %430 = vmatprep.subr.bf16.mxu0 0
    %431 = vmatpush1.bf16.msra.mxu0 0
    %432 = vmatprep.subr.bf16.mxu0 0
    %433 = vmatpush1.bf16.msra.mxu0 0
    %434 = vmatprep.subr.bf16.mxu0 0
    %435 = vmatpush1.bf16.msra.mxu0 0
    %436 = vmatprep.subr.bf16.mxu0 0
    %437 = vmatpush1.bf16.msra.mxu0 0
    %438 = vmatprep.subr.bf16.mxu0 0
    %439 = vmatpush1.bf16.msra.mxu0 0
    %440 = vmatprep.subr.bf16.mxu0 0
    %441 = vmatpush1.bf16.msra.mxu0 0
    %442 = vmatprep.subr.bf16.mxu0 0
    %443 = vmatpush1.bf16.msra.mxu0 0
    %444 = vmatprep.subr.bf16.mxu0 0
    %445 = vmatpush1.bf16.msra.mxu0 0
    %446 = vmatprep.subr.bf16.mxu0 0
    %447 = vmatpush1.bf16.msra.mxu0 0
    %448 = vmatprep.subr.bf16.mxu0 0
    %449 = vmatpush1.bf16.msra.mxu0 0
    %450 = vmatprep.subr.bf16.mxu0 0
    %451 = vmatpush1.bf16.msra.mxu0 0
    %452 = vmatprep.subr.bf16.mxu0 0
    %453 = vmatpush1.bf16.msra.mxu0 0
    %454 = vmatprep.mubr.bf16.mxu0 0
    %455 = vmatmul.mubr.bf16.gmra.mrb[0].mxu0 %v420
    %v456 = vpop.f32.mrb[0].mxu0
    %v457 = vadd.f32 %v392, %v456
    %v458 = vpop.f32.mrb[0].mxu0
    %v459 = vpop.f32.mrb[0].mxu0
    %v460 = vpop.f32.mrb[0].mxu0
    %461 = vdwg.mxu0
    %v462 = vmax.f32 %v457, 0.0
    %vm463 = vcmask 80896
    %464 = vst.msk [vmem:[#allocation2] sm:$0xff] %vm463, %v462
    // Predicated region
    $region30: #{tpu_custom_call.1} parent=1 // pred_check
      _
    $region31: #{tpu_custom_call.1} parent=1 // pred_check_branch
      %466 = sbr.rel (0) target = $region33
    $region32: #{tpu_custom_call.1} parent=1 // pred_region
      %s468 = ssub.s32 128, 128
      %469 = vsyncadd [#allocation3], %s468
      %s471 = sshll.u32 [#allocation2], 4
      %s472 = int_to_ptr.vmem [resolvable:$true] %s471
      %474 = dma.vmem_to_hbm [thread:$0]  %s472, 128, %s7, [#allocation3]
    $region33: #{tpu_custom_call.1} parent=1 // pred_fallthru
      _
    // Predicated region
    $region34: #{tpu_custom_call.1} parent=1 // pred_check
      _
    $region35: #{tpu_custom_call.1} parent=1 // pred_check_branch
      %476 = sbr.rel (0) target = $region37
    $region36: #{tpu_custom_call.1} parent=1 // pred_region
      %477 = dma.done [#allocation3], 128
    $region37: #{tpu_custom_call.1} parent=1 // pred_fallthru
      _
    %478 = vsyncpa [#allocation3], 1

</llo_original>
